<compile_context>
chip_gen: v5e
topology: v5e:2x2
jax: 0.10.0
libtpu: 0.0.40
codegen_flags: <defaults>
</compile_context>

<pallas_src>
import jax
import jax.numpy as jnp
from jax.experimental import pallas as pl
from jax.experimental.pallas import tpu as pltpu

EPS = 1e-6                       # matches the +1e-06 in the PyTorch forward
_TARGET_BLOCK_BYTES = 8 << 20    # aim for 2-8 MiB DMA blocks


# --------------------------------------------------------------------------- #
# Kernels
# --------------------------------------------------------------------------- #
def _grn_slab_kernel(x_ref, gamma_ref, beta_ref, o_ref):
    # x_ref / o_ref: (bt, T, C); gamma_ref / beta_ref: (1, 1, C) resident.
    # --- sweep 1: statistics (accumulated in f32) ---------------------------
    x32 = x_ref[...].astype(jnp.float32)                        # (bt, T, C)
    gx2 = jnp.sum(x32 * x32, axis=1, keepdims=True)             # (bt, 1, C)
    gx = jnp.sqrt(gx2)                                           # L2 norm over T
    gmean = jnp.mean(gx, axis=-1, keepdims=True)                 # (bt, 1, 1)
    nx = gx / (gmean + EPS)                                      # (bt, 1, C)

    # gamma*(x*Nx) + beta + x  ==  x * (gamma*Nx + 1) + beta
    scale = gamma_ref[...].astype(jnp.float32) * nx + 1.0        # (bt, 1, C)
    shift = beta_ref[...].astype(jnp.float32)                    # (1, 1, C)

    # --- sweep 2: fused apply + store (re-read x so the f32 temp from sweep 1
    # is not kept live across the whole kernel for bf16/fp8 inputs) ----------
    o_ref[...] = (x_ref[...].astype(jnp.float32) * scale + shift).astype(o_ref.dtype)


def _grn_stats_kernel(x_ref, gx2_ref):
    # x_ref: (1, Tt, C) tile; gx2_ref: (1, 1, C) f32 accumulator (resident
    # across the T-tile axis because its block index does not depend on t).
    t = pl.program_id(1)

    @pl.when(t == 0)
    def _():
        gx2_ref[...] = jnp.zeros_like(gx2_ref)

    x32 = x_ref[0].astype(jnp.float32)                           # (Tt, C)
    gx2_ref[0] = gx2_ref[0] + jnp.sum(x32 * x32, axis=0, keepdims=True)


def _grn_apply_kernel(x_ref, scale_ref, shift_ref, o_ref):
    # x_ref / o_ref: (1, Tt, C); scale_ref: (1, 1, C) per batch; shift: (1, 1, C).
    x32 = x_ref[0].astype(jnp.float32)                           # (Tt, C)
    o_ref[0] = (x32 * scale_ref[0] + shift_ref[0]).astype(o_ref.dtype)


# --------------------------------------------------------------------------- #
# Tiling / dispatch helpers
# --------------------------------------------------------------------------- #
def _vmem_limit_bytes():
    """Generation-aware scoped-VMEM limit with headroom."""
    try:
        cap = int(pltpu.get_tpu_info().vmem_capacity_bytes)
    except Exception:
        cap = 64 * 1024 * 1024            # conservative (v7x physical per TC)
    # ~54 MiB on v7x (64 MiB), ~108 MiB on v5e/v6e (128 MiB).
    return min(int(cap * 0.85), 112 * 1024 * 1024)


def _choose_bt(n, per_batch_bytes, budget_bytes, target_bytes):
    """Largest batch-pack factor whose double-buffered in+out blocks fit,
    preferring an even grid extent (v7x megacore)."""
    candidates = [
        bt for bt in range(1, n + 1)
        if n % bt == 0
        and 4 * bt * per_batch_bytes <= budget_bytes
        and bt * per_batch_bytes <= target_bytes
    ]
    if not candidates:
        return 1
    even = [bt for bt in candidates if (n // bt) % 2 == 0]
    return max(even) if even else max(candidates)


def _choose_t_tile(t, row_bytes, budget_bytes, target_bytes):
    """Largest divisor of T (multiple of 8 preferred) whose double-buffered
    blocks fit the VMEM budget."""
    divisors = [d for d in range(1, t + 1) if t % d == 0]
    fitting = [d for d in divisors if 4 * d * row_bytes <= budget_bytes]
    if not fitting:
        return 1
    good = [d for d in fitting if d * row_bytes <= target_bytes]
    pool = good if good else [min(fitting)]
    mult8 = [d for d in pool if d % 8 == 0]
    return max(mult8) if mult8 else max(pool)


# --------------------------------------------------------------------------- #
# pallas_call wrappers
# --------------------------------------------------------------------------- #
def _grn_whole_slab(x, gamma3, beta3, bt, vmem_limit):
    n, t, c = x.shape
    return pl.pallas_call(
        _grn_slab_kernel,
        out_shape=jax.ShapeDtypeStruct((n, t, c), x.dtype),
        grid_spec=pltpu.PrefetchScalarGridSpec(
            num_scalar_prefetch=0,
            grid=(n // bt,),
            in_specs=[
                pl.BlockSpec((bt, t, c), lambda i: (i, 0, 0)),    # x, batch-packed
                pl.BlockSpec((1, 1, c), lambda i: (0, 0, 0)),     # gamma (resident)
                pl.BlockSpec((1, 1, c), lambda i: (0, 0, 0)),     # beta  (resident)
            ],
            out_specs=pl.BlockSpec((bt, t, c), lambda i: (i, 0, 0)),
        ),
        compiler_params=pltpu.CompilerParams(
            dimension_semantics=("parallel",),        # megacore sharding on v7x
            vmem_limit_bytes=vmem_limit,
        ),
    )(x, gamma3, beta3)


def _grn_two_phase(x, gamma3, beta3, vmem_limit, budget):
    n, t, c = x.shape
    itemsize = jnp.dtype(x.dtype).itemsize
    tt = _choose_t_tile(t, c * itemsize, budget, 4 << 20)
    n_t = t // tt
    # TODO(synk): if T has no divisor whose tiles fit the VMEM budget (huge
    # prime T), this still compiles with the largest fitting divisor (possibly
    # 1 row per tile); a remainder-masked tile would be nicer.

    # Phase 1: per-(batch, channel) sum of squares, accumulated over T tiles.
    gx2 = pl.pallas_call(
        _grn_stats_kernel,
        out_shape=jax.ShapeDtypeStruct((n, 1, c), jnp.float32),
        grid_spec=pltpu.PrefetchScalarGridSpec(
            num_scalar_prefetch=0,
            grid=(n, n_t),
            in_specs=[pl.BlockSpec((1, tt, c), lambda b, k: (b, k, 0))],
            out_specs=pl.BlockSpec((1, 1, c), lambda b, k: (b, 0, 0)),
        ),
        compiler_params=pltpu.CompilerParams(
            dimension_semantics=("parallel", "arbitrary"),
            vmem_limit_bytes=vmem_limit,
        ),
    )(x)

    # Tiny (N, C) math stays in plain JAX between the two kernels.
    gx = jnp.sqrt(gx2)                                            # (N, 1, C)
    nx = gx / (jnp.mean(gx, axis=-1, keepdims=True) + EPS)        # (N, 1, C)
    scale = gamma3.astype(jnp.float32) * nx + 1.0                 # (N, 1, C)
    shift = beta3.astype(jnp.float32)                             # (1, 1, C)

    # Phase 2: elementwise apply over T tiles (fully parallel grid).
    return pl.pallas_call(
        _grn_apply_kernel,
        out_shape=jax.ShapeDtypeStruct((n, t, c), x.dtype),
        grid_spec=pltpu.PrefetchScalarGridSpec(
            num_scalar_prefetch=0,
            grid=(n, n_t),
            in_specs=[
                pl.BlockSpec((1, tt, c), lambda b, k: (b, k, 0)),  # x
                pl.BlockSpec((1, 1, c), lambda b, k: (b, 0, 0)),   # per-batch scale
                pl.BlockSpec((1, 1, c), lambda b, k: (0, 0, 0)),   # beta (resident)
            ],
            out_specs=pl.BlockSpec((1, tt, c), lambda b, k: (b, k, 0)),
        ),
        compiler_params=pltpu.CompilerParams(
            dimension_semantics=("parallel", "parallel"),
            vmem_limit_bytes=vmem_limit,
        ),
    )(x, scale, shift)


def grn(x, gamma, beta):
    """GRN forward.  x: (N, T, C); gamma, beta: (1, 1, C) as in the module."""
    n, t, c = x.shape
    gamma3 = jnp.asarray(gamma).reshape(1, 1, c)
    beta3 = jnp.asarray(beta).reshape(1, 1, c)

    itemsize = jnp.dtype(x.dtype).itemsize
    vmem_limit = _vmem_limit_bytes()
    budget = int(vmem_limit * 0.75)       # headroom for params / compiler scratch
    per_batch = t * c * itemsize          # one (T, C) slab

    if 4 * per_batch <= budget:           # double-buffered in + out slabs fit
        bt = _choose_bt(n, per_batch, budget, _TARGET_BLOCK_BYTES)
        return _grn_whole_slab(x, gamma3, beta3, bt, vmem_limit)
    # Fallback (hits first on v7x's 64 MiB VMEM): 1.5x HBM traffic two-phase.
    return _grn_two_phase(x, gamma3, beta3, vmem_limit, budget)


def grn_ref(x, gamma, beta):
    """Pure-JAX reference matching the PyTorch forward."""
    gx = jnp.sqrt(jnp.sum(x * x, axis=1, keepdims=True))          # (N, 1, C)
    nx = gx / (jnp.mean(gx, axis=-1, keepdims=True) + EPS)        # (N, 1, C)
    return gamma * (x * nx) + beta + x


if __name__ == "__main__":
    # Small but lane-dense shapes: T multiple of 8, C multiple of 128.
    N, T, C = 2, 16, 128

    key = jax.random.PRNGKey(0)
    kx, kg, kb = jax.random.split(key, 3)

    x = jax.random.normal(kx, (N, T, C), dtype=jnp.float32)
    # Module init is zeros; use small random values so gamma/beta paths matter.
    gamma = jax.random.normal(kg, (1, 1, C), dtype=jnp.float32) * 0.1
    beta = jax.random.normal(kb, (1, 1, C), dtype=jnp.float32) * 0.1

    ref = grn_ref(x, gamma, beta)

    # Main (whole-slab, batch-packed) path.
    out = jax.block_until_ready(grn(x, gamma, beta))
    assert out.shape == (N, T, C)
    assert jnp.allclose(out, ref, atol=1e-5, rtol=1e-5), "whole-slab mismatch"

    # Force the two-phase fallback (tiny budget -> T tiled) and check it too.
    out2 = jax.block_until_ready(
        _grn_two_phase(x, gamma.reshape(1, 1, C), beta.reshape(1, 1, C),
                       _vmem_limit_bytes(), budget=20_000))
    assert jnp.allclose(out2, ref, atol=1e-5, rtol=1e-5), "two-phase mismatch"

    # bf16 input exercises the re-read/re-cast sweep-2 path.
    xb = x.astype(jnp.bfloat16)
    outb = jax.block_until_ready(grn(xb, gamma, beta))
    refb = grn_ref(xb.astype(jnp.float32), gamma, beta)
    assert jnp.allclose(outb.astype(jnp.float32), refb, atol=3e-2, rtol=3e-2), \
        "bf16 mismatch"

    print("KERNEL_OK")
</pallas_src>

<mosaic_0001>
module attributes {stable_mosaic.version = 11 : i64} {
  func.func @_grn_slab_kernel(%arg0: i32, %arg1: memref<1x16x128xf32, #tpu.memory_space<vmem>>, %arg2: memref<1x1x128xf32, #tpu.memory_space<vmem>>, %arg3: memref<1x1x128xf32, #tpu.memory_space<vmem>>, %arg4: memref<1x16x128xf32, #tpu.memory_space<vmem>>) attributes {dimension_semantics = [#tpu.dimension_semantics<parallel>], iteration_bounds = array<i64: 2>, scalar_prefetch = 0 : i64, scratch_operands = 0 : i64, tpu.core_type = #tpu.core_type<tc>, window_params = [{transform_indices = @transform_0, window_bounds = array<i64: 1, 16, 128>}, {pipeline_mode = #tpu.pipeline_mode<synchronous>, transform_indices = @transform_1, window_bounds = array<i64: 1, 1, 128>}, {pipeline_mode = #tpu.pipeline_mode<synchronous>, transform_indices = @transform_2, window_bounds = array<i64: 1, 1, 128>}, {transform_indices = @transform_3, window_bounds = array<i64: 1, 16, 128>}]} {
    %c0 = arith.constant 0 : index
    %c0_0 = arith.constant 0 : index
    %c0_1 = arith.constant 0 : index
    %0 = vector.load %arg1[%c0, %c0_0, %c0_1] : memref<1x16x128xf32, #tpu.memory_space<vmem>>, vector<1x16x128xf32>
    %1 = arith.mulf %0, %0 : vector<1x16x128xf32>
    %cst = arith.constant dense<0.000000e+00> : vector<1x128xf32>
    %2 = vector.multi_reduction <add>, %1, %cst [1] : vector<1x16x128xf32> to vector<1x128xf32>
    %3 = vector.shape_cast %2 : vector<1x128xf32> to vector<1x1x128xf32>
    %4 = math.sqrt %3 : vector<1x1x128xf32>
    %cst_2 = arith.constant dense<0.000000e+00> : vector<1x1xf32>
    %5 = vector.multi_reduction <add>, %4, %cst_2 [2] : vector<1x1x128xf32> to vector<1x1xf32>
    %6 = vector.shape_cast %5 : vector<1x1xf32> to vector<1x1x1xf32>
    %cst_3 = arith.constant 1.280000e+02 : f32
    %7 = vector.broadcast %cst_3 : f32 to vector<1x1x1xf32>
    %8 = arith.divf %6, %7 : vector<1x1x1xf32>
    %cst_4 = arith.constant 9.99999997E-7 : f32
    %9 = vector.broadcast %cst_4 : f32 to vector<1x1x1xf32>
    %10 = arith.addf %8, %9 : vector<1x1x1xf32>
    %11 = vector.broadcast %10 : vector<1x1x1xf32> to vector<1x1x128xf32>
    %12 = arith.divf %4, %11 : vector<1x1x128xf32>
    %c0_5 = arith.constant 0 : index
    %c0_6 = arith.constant 0 : index
    %c0_7 = arith.constant 0 : index
    %13 = vector.load %arg2[%c0_5, %c0_6, %c0_7] : memref<1x1x128xf32, #tpu.memory_space<vmem>>, vector<1x1x128xf32>
    %14 = arith.mulf %13, %12 : vector<1x1x128xf32>
    %cst_8 = arith.constant 1.000000e+00 : f32
    %15 = vector.broadcast %cst_8 : f32 to vector<1x1x128xf32>
    %16 = arith.addf %14, %15 : vector<1x1x128xf32>
    %c0_9 = arith.constant 0 : index
    %c0_10 = arith.constant 0 : index
    %c0_11 = arith.constant 0 : index
    %17 = vector.load %arg3[%c0_9, %c0_10, %c0_11] : memref<1x1x128xf32, #tpu.memory_space<vmem>>, vector<1x1x128xf32>
    %c0_12 = arith.constant 0 : index
    %c0_13 = arith.constant 0 : index
    %c0_14 = arith.constant 0 : index
    %18 = vector.load %arg1[%c0_12, %c0_13, %c0_14] : memref<1x16x128xf32, #tpu.memory_space<vmem>>, vector<1x16x128xf32>
    %19 = vector.broadcast %16 : vector<1x1x128xf32> to vector<1x16x128xf32>
    %20 = arith.mulf %18, %19 : vector<1x16x128xf32>
    %21 = vector.broadcast %17 : vector<1x1x128xf32> to vector<1x16x128xf32>
    %22 = arith.addf %20, %21 : vector<1x16x128xf32>
    %c0_15 = arith.constant 0 : index
    %c0_16 = arith.constant 0 : index
    %c0_17 = arith.constant 0 : index
    %23 = vector.load %arg4[%c0_15, %c0_16, %c0_17] : memref<1x16x128xf32, #tpu.memory_space<vmem>>, vector<1x16x128xf32>
    tpu.vector_store %arg4[%c0_15, %c0_16, %c0_17], %22 {strides = array<i32>} : memref<1x16x128xf32, #tpu.memory_space<vmem>>, vector<1x16x128xf32>,
    return
  }
  func.func @transform_0(%arg0: i32) -> (i32, i32, i32) {
    %c0_i32 = arith.constant 0 : i32
    %c0_i32_0 = arith.constant 0 : i32
    %c0_i32_1 = arith.constant 0 : i32
    return %arg0, %c0_i32, %c0_i32_0 : i32, i32, i32
  }
  func.func @transform_1(%arg0: i32) -> (i32, i32, i32) {
    %c0_i32 = arith.constant 0 : i32
    %c0_i32_0 = arith.constant 0 : i32
    %c0_i32_1 = arith.constant 0 : i32
    %c0_i32_2 = arith.constant 0 : i32
    return %c0_i32, %c0_i32_0, %c0_i32_1 : i32, i32, i32
  }
  func.func @transform_2(%arg0: i32) -> (i32, i32, i32) {
    %c0_i32 = arith.constant 0 : i32
    %c0_i32_0 = arith.constant 0 : i32
    %c0_i32_1 = arith.constant 0 : i32
    %c0_i32_2 = arith.constant 0 : i32
    return %c0_i32, %c0_i32_0, %c0_i32_1 : i32, i32, i32
  }
  func.func @transform_3(%arg0: i32) -> (i32, i32, i32) {
    %c0_i32 = arith.constant 0 : i32
    %c0_i32_0 = arith.constant 0 : i32
    %c0_i32_1 = arith.constant 0 : i32
    return %arg0, %c0_i32, %c0_i32_0 : i32, i32, i32
  }
}

</mosaic_0001>

<llo_original>
// kernel: tpu_custom_call.1
$region0: #{tpu_custom_call.1}
  #allocation0 [shape = 'u32[]', space=smem, size = 0x4, offset = 0x4, fixed_abs, tag = 'smem constant byte address 0x4 - core index']
  #allocation1 [shape = 'u32[72,128]{1,0:T(1,128)}', space=vmem, size = 0x9000, scoped, tag = 'internal scratch']
  %s0 = inlined_call_operand.hbm [shape: f32[2,16,128], index: 0, kind: input, shape index: {}]
  %s1 = inlined_call_operand.hbm [shape: f32[1,1,128], index: 1, kind: input, shape index: {}]
  %s2 = inlined_call_operand.vmem [shape: f32[1,1,128], index: 2, kind: input, shape index: {}]
  %s3 = inlined_call_operand.hbm [shape: f32[2,16,128], index: 3, kind: output, shape index: {}]
  %s4 = sld [smem:[#allocation0]]
  $region53: #{tpu_custom_call.1} parent=0
    _
  %s6 = ssub.s32 1, %s4
  %s7 = scalar_select 0, %s6, %s4
  $region1: #{tpu_custom_call.1} parent=0
    #allocation2 [shape = 'u8[16384]{0}', space=vmem, size = 0x4000, scoped, tag = 'input window, operand 0']
    #allocation3 [shape = 's32[2]{0}', space=sflag, size = 0x8, scoped, tag = 'scoped memory for tpu_custom_call.1']
    #allocation4 [shape = 's32[2]{0}', space=sflag, size = 0x8, scoped, tag = 'scoped memory for tpu_custom_call.1']
    #allocation5 [shape = 'u8[512]{0}', space=vmem, size = 0x400, scoped, tag = 'input window, operand 1, single buffered']
    #allocation6 [shape = 's32[1]{0}', space=sflag, size = 0x4, scoped, tag = 'scoped memory for tpu_custom_call.1']
    #allocation7 [shape = 'u8[16384]{0}', space=vmem, size = 0x4000, scoped, tag = 'output window, operand 0']
    %8 = vsyncpa [#allocation3], 0
    %s9 = scalar_lea.sflag [#allocation3], 1
    %10 = vsyncpa %s9, 0
    %11 = vsyncpa [#allocation6], 0
    %12 = vsyncpa [#allocation4], 0
    %s13 = scalar_lea.sflag [#allocation4], 1
    %14 = vsyncpa %s13, 0
    loop: start=0, step=1, limit=4
    $region2: #{tpu_custom_call.1} parent=1 // loop_pre_header
      _
    $region3: #{tpu_custom_call.1} parent=1 // loop_header
      %s16 = sphi 0, %s20
      %p17 = scmp.ge.s32.totalorder %s16, 4
      %s26 = sphi 0, %s28
      %s29 = sphi 0, %s26
      %s30 = sphi 0, %s29
      %s46 = sphi 0, %s30
      %s50 = sphi 0, %s50
      %s52 = sphi 0, %s50
      %s53 = sphi 0, %s52
      %s67 = sphi 0, %s53
      %s71 = sphi 0, %s71
      %s73 = sphi 0, %s71
      %s74 = sphi 0, %s73
      %s88 = sphi 0, %s74
      %s94 = sphi 0, %s96
      %s97 = sphi 0, %s94
      %s98 = sphi 0, %s97
      %s114 = sphi 0, %s98
    $region4: #{tpu_custom_call.1} parent=1 // loop_header_branch
      %19 = sbr.rel (%p17) target = $region8
    $region5: #{tpu_custom_call.1} parent=1 // loop_body
      %s21 = ssub.s32 %s16, 1
      %s22 = ssub.s32 %s16, 2
      %s23 = sadd.s32 %s16, 1
      %s24 = ssub.s32 %s16, %s23
      %p25 = scmp.eq.s32.totalorder %s24, 0
      %s27 = sadd.s32 %s26, 1
      %s28 = scalar_select %p25, %s26, %s27
      %p31 = pneg %p25
      %p32 = scmp.eq.s32.totalorder %s16, 1
      %p33 = por %p31, %p32
      %p34 = scmp.ne.s32.totalorder %s26, %s29
      %p35 = scmp.eq.s32.totalorder %s16, 0
      %p36 = por %p34, %p35
      %p37 = scmp.ne.s32.totalorder %s26, %s29
      %p38 = scmp.eq.s32.totalorder %s21, 1
      %p39 = por %p37, %p38
      %p40 = scmp.ne.s32.totalorder %s29, %s30
      %p41 = scmp.eq.s32.totalorder %s21, 0
      %p42 = por %p40, %p41
      %p43 = scmp.ne.s32.totalorder %s29, %s30
      %p44 = scmp.eq.s32.totalorder %s22, 1
      %p45 = por %p43, %p44
      %p47 = scmp.ne.s32.totalorder %s30, %s46
      %p48 = scmp.eq.s32.totalorder %s22, 0
      %p49 = por %p47, %p48
      %s51 = sadd.s32 %s50, 1
      %p54 = scmp.eq.s32.totalorder %s16, 1
      %p55 = scmp.ne.s32.totalorder %s50, %s52
      %p56 = scmp.eq.s32.totalorder %s16, 0
      %p57 = por %p55, %p56
      %p58 = scmp.ne.s32.totalorder %s50, %s52
      %p59 = scmp.eq.s32.totalorder %s21, 1
      %p60 = por %p58, %p59
      %p61 = scmp.ne.s32.totalorder %s52, %s53
      %p62 = scmp.eq.s32.totalorder %s21, 0
      %p63 = por %p61, %p62
      %p64 = scmp.ne.s32.totalorder %s52, %s53
      %p65 = scmp.eq.s32.totalorder %s22, 1
      %p66 = por %p64, %p65
      %p68 = scmp.ne.s32.totalorder %s53, %s67
      %p69 = scmp.eq.s32.totalorder %s22, 0
      %p70 = por %p68, %p69
      %s72 = sadd.s32 %s71, 1
      %p75 = scmp.eq.s32.totalorder %s16, 1
      %p76 = scmp.ne.s32.totalorder %s71, %s73
      %p77 = scmp.eq.s32.totalorder %s16, 0
      %p78 = por %p76, %p77
      %p79 = scmp.ne.s32.totalorder %s71, %s73
      %p80 = scmp.eq.s32.totalorder %s21, 1
      %p81 = por %p79, %p80
      %p82 = scmp.ne.s32.totalorder %s73, %s74
      %p83 = scmp.eq.s32.totalorder %s21, 0
      %p84 = por %p82, %p83
      %p85 = scmp.ne.s32.totalorder %s73, %s74
      %p86 = scmp.eq.s32.totalorder %s22, 1
      %p87 = por %p85, %p86
      %p89 = scmp.ne.s32.totalorder %s74, %s88
      %p90 = scmp.eq.s32.totalorder %s22, 0
      %p91 = por %p89, %p90
      %s92 = ssub.s32 %s16, %s23
      %p93 = scmp.eq.s32.totalorder %s92, 0
      %s95 = sadd.s32 %s94, 1
      %s96 = scalar_select %p93, %s94, %s95
      %p99 = pneg %p93
      %p100 = scmp.eq.s32.totalorder %s16, 1
      %p101 = por %p99, %p100
      %p102 = scmp.ne.s32.totalorder %s94, %s97
      %p103 = scmp.eq.s32.totalorder %s16, 0
      %p104 = por %p102, %p103
      %p105 = scmp.ne.s32.totalorder %s94, %s97
      %p106 = scmp.eq.s32.totalorder %s21, 1
      %p107 = por %p105, %p106
      %p108 = scmp.ne.s32.totalorder %s97, %s98
      %p109 = scmp.eq.s32.totalorder %s21, 0
      %p110 = por %p108, %p109
      %p111 = scmp.ne.s32.totalorder %s97, %s98
      %p112 = scmp.eq.s32.totalorder %s22, 1
      %p113 = por %p111, %p112
      %p115 = scmp.ne.s32.totalorder %s98, %s114
      %p116 = scmp.eq.s32.totalorder %s22, 0
      %p117 = por %p115, %p116
      %p118 = scmp.le.s32.totalorder 1, %s16
      %p119 = scmp.lt.s32.totalorder %s16, 3
      %p120 = pnand %p118, %p119
      %p121 = pneg %p120
      // Predicated region
      $region9: #{tpu_custom_call.1} parent=5 // pred_check
        _
      $region10: #{tpu_custom_call.1} parent=5 // pred_check_branch
        %123 = sbr.rel (%p120) target = $region12
      $region11: #{tpu_custom_call.1} parent=5 // pred_region
        %s124 = ssub.s32 %s16, 1
        // Predicated region
        $region13: #{tpu_custom_call.1} parent=11 // pred_check
          %p125 = pneg %p63
        $region14: #{tpu_custom_call.1} parent=11 // pred_check_branch
          %127 = sbr.rel (%p125) target = $region16
        $region15: #{tpu_custom_call.1} parent=11 // pred_region
          %129 = vsyncadd [#allocation6], 0
          %s131 = sshll.u32 %s1, 4
          %s132 = int_to_ptr.hbm [resolvable:$true] %s131
          %s133 = sshll.u32 [#allocation5], 4
          %s134 = int_to_ptr.vmem [resolvable:$true] %s133
          %136 = dma.hbm_to_vmem [thread:$0]  %s132, 16, %s134, [#allocation6]
        $region16: #{tpu_custom_call.1} parent=11 // pred_fallthru
          _
        // Predicated region
        $region17: #{tpu_custom_call.1} parent=11 // pred_check
          %p137 = pneg %p84
        $region18: #{tpu_custom_call.1} parent=11 // pred_check_branch
          %139 = sbr.rel (%p137) target = $region20
        $region19: #{tpu_custom_call.1} parent=11 // pred_region
          _
        $region20: #{tpu_custom_call.1} parent=11 // pred_fallthru
          _
      $region12: #{tpu_custom_call.1} parent=5 // pred_fallthru
        _
      %p140 = scmp.lt.s32.totalorder %s16, 2
      // Predicated region
      $region21: #{tpu_custom_call.1} parent=5 // pred_check
        %p141 = pneg %p140
      $region22: #{tpu_custom_call.1} parent=5 // pred_check_branch
        %143 = sbr.rel (%p141) target = $region24
      $region23: #{tpu_custom_call.1} parent=5 // pred_region
        // Predicated region
        $region25: #{tpu_custom_call.1} parent=23 // pred_check
          %p144 = pneg %p36
        $region26: #{tpu_custom_call.1} parent=23 // pred_check_branch
          %146 = sbr.rel (%p144) target = $region28
        $region27: #{tpu_custom_call.1} parent=23 // pred_region
          %s147 = sand.u32 %s26, 1
          %s148 = scalar_lea.sflag [#allocation3], %s147
          %s149 = sand.u32 %s26, 1
          %s150 = smul.addr %s149, 16
          %s151 = scalar_lea.vmem [#allocation2], %s150
          %153 = vsyncadd %s148, 0
          %s154 = smul.addr %s16, 2
          %s155 = smul.addr %s154, 8
          %s156 = scalar_lea.hbm %s0, %s155
          %s157 = sshll.u32 %s156, 4
          %s158 = int_to_ptr.hbm [resolvable:$true] %s157
          %s159 = sshll.u32 %s151, 4
          %s160 = int_to_ptr.vmem [resolvable:$true] %s159
          %165 = dma.hbm_to_vmem [thread:$0]  %s158, 256, %s160, %s148, 128, 128, 8
        $region28: #{tpu_custom_call.1} parent=23 // pred_fallthru
          _
      $region24: #{tpu_custom_call.1} parent=5 // pred_fallthru
        _
      %p166 = scmp.le.s32.totalorder 1, %s16
      %p167 = scmp.lt.s32.totalorder %s16, 3
      %p168 = pnand %p166, %p167
      %p169 = pneg %p168
      // Predicated region
      $region29: #{tpu_custom_call.1} parent=5 // pred_check
        _
      $region30: #{tpu_custom_call.1} parent=5 // pred_check_branch
        %171 = sbr.rel (%p168) target = $region32
      $region31: #{tpu_custom_call.1} parent=5 // pred_region
        %s172 = ssub.s32 %s16, 1
        %s173 = sand.u32 %s29, 1
        %s174 = scalar_lea.sflag [#allocation3], %s173
        %s175 = sand.u32 %s29, 1
        %s176 = smul.addr %s175, 16
        %s177 = scalar_lea.vmem [#allocation2], %s176
        // Predicated region
        $region33: #{tpu_custom_call.1} parent=31 // pred_check
          %p178 = pneg %p42
        $region34: #{tpu_custom_call.1} parent=31 // pred_check_branch
          %180 = sbr.rel (%p178) target = $region36
        $region35: #{tpu_custom_call.1} parent=31 // pred_region
          %182 = dma.done %s174, 256
        $region36: #{tpu_custom_call.1} parent=31 // pred_fallthru
          _
        // Predicated region
        $region37: #{tpu_custom_call.1} parent=31 // pred_check
          %p183 = pneg %p63
        $region38: #{tpu_custom_call.1} parent=31 // pred_check_branch
          %185 = sbr.rel (%p183) target = $region40
        $region39: #{tpu_custom_call.1} parent=31 // pred_region
          %187 = dma.done [#allocation6], 16
        $region40: #{tpu_custom_call.1} parent=31 // pred_fallthru
          _
        %s188 = sand.u32 %s29, 1
        %s189 = scalar_lea.sflag [#allocation3], %s188
        %s190 = sand.u32 %s29, 1
        %s191 = smul.addr %s190, 16
        %s192 = scalar_lea.vmem [#allocation2], %s191
        %p193 = pneg %p42
        %p194 = pneg %p39
        %p195 = pneg %p63
        %p196 = pneg %p60
        %p197 = pneg %p84
        %p198 = pneg %p81
        %p199 = pneg %p110
        %p200 = pneg %p107
        %s201 = sand.u32 %s97, 1
        %s202 = scalar_lea.sflag [#allocation4], %s201
        %s203 = sand.u32 %s97, 1
        %s204 = smul.addr %s203, 16
        %s205 = scalar_lea.vmem [#allocation7], %s204
        %v206 = vld [vmem:[%s177] sm:$0xff]
        %v207 = vld [vmem:[%s177 + $0x8] sm:$0xff]
        %v208 = vmul.f32 %v206, %v206
        %v209 = vmul.f32 %v207, %v207
        %v210 = vadd.f32 %v208, %v209
        %v211 = vrot.slane %v210, 4
        %v212 = vadd.f32 %v210, %v211
        %v213 = vrot.slane %v212, 2
        %v214 = vadd.f32 %v212, %v213
        %v215 = vrot.slane %v214, 1
        %v216 = vadd.f32 %v214, %v215
        %v217 = vrsqrt.pop %v216
        %v218 = vmul.f32 %v217, %v216
        %v219 = vmul.f32 %v218, %v217
        %v220 = vmul.f32 0.5, %v219
        %v221 = vsub.f32 1.5, %v220
        %v222 = vmul.f32 %v217, %v221
        %v223 = vmul.f32 %v216, %v222
        %vm224 = vcmp.eq.f32.partialorder %v216, inf
        %v225 = vsel %vm224, %v216, %v223
        %vm226 = vcmp.eq.f32.partialorder %v216, 0.0
        %v227 = vand.u32 %v216, 2147483648
        %v228 = vsel %vm226, %v227, %v225
        %229 = vadd.xlane.f32.xlu0 %v228
        %v230 = vpop.xlane.xlu0 %229
        %v231 = vrcp.pop 128.0
        %v232 = vmul.f32 128.0, %v231
        %v233 = vsub.f32 1.0, %v232
        %v234 = vmul.f32 %v231, %v233
        %v235 = vadd.f32 %v231, %v234
        %vm236 = vweird.f32 %v231
        %v237 = vsel %vm236, %v231, %v235
        %v238 = vmul.f32 %v230, %v237
        %v239 = vadd.f32 %v238, 1e-06
        %v240 = vrcp.pop %v239
        %v241 = vmul.f32 %v239, %v240
        %v242 = vsub.f32 1.0, %v241
        %v243 = vmul.f32 %v240, %v242
        %v244 = vadd.f32 %v240, %v243
        %vm245 = vweird.f32 %v239
        %vm246 = vweird.f32 %v240
        %vm247 = vmor %vm245, %vm246
        %v248 = vsel %vm247, %v240, %v244
        %v249 = vand.u32 2147483647, %v239
        %vm250 = vcmp.eq.f32.partialorder %v249, 8.507059e+37
        %v251 = vand.u32 %v239, 2147483648
        %v252 = vor.u32 1.1754944e-38, %v251
        %v253 = vsel %vm250, %v252, %v248
        %v254 = vmul.f32 %v228, %v253
        %v255 = vld [vmem:[#allocation5] sm:$0x1]
        %v256 = vmul.f32 %v255, %v254
        %v257 = vadd.f32 %v256, 1.0
        %v258 = vld [vmem:[%s2] sm:$0x1]
        %v260 = vperm.slane %v257, 0
        %v262 = vmul.f32 %v206, %v260
        %v263 = vmul.f32 %v207, %v260
        %v265 = vperm.slane %v258, 0
        %v267 = vadd.f32 %v262, %v265
        %v268 = vadd.f32 %v263, %v265
        %269 = vst [vmem:[%s205] sm:$0xff] %v267
        %270 = vst [vmem:[%s205 + $0x8] sm:$0xff] %v268
        %s271 = sand.u32 %s97, 1
        %s272 = scalar_lea.sflag [#allocation4], %s271
        %s273 = sand.u32 %s97, 1
        %s274 = smul.addr %s273, 16
        %s275 = scalar_lea.vmem [#allocation7], %s274
        // Predicated region
        $region41: #{tpu_custom_call.1} parent=31 // pred_check
          %p276 = pneg %p107
        $region42: #{tpu_custom_call.1} parent=31 // pred_check_branch
          %278 = sbr.rel (%p276) target = $region44
        $region43: #{tpu_custom_call.1} parent=31 // pred_region
          %280 = vsyncadd %s272, 0
          %s281 = smul.addr %s21, 2
          %s282 = smul.addr %s281, 8
          %s283 = scalar_lea.hbm %s3, %s282
          %s284 = sshll.u32 %s275, 4
          %s285 = int_to_ptr.vmem [resolvable:$true] %s284
          %s286 = sshll.u32 %s283, 4
          %s287 = int_to_ptr.hbm [resolvable:$true] %s286
          %292 = dma.vmem_to_hbm [thread:$0]  %s285, 256, %s287, %s272, 128, 128, 8
        $region44: #{tpu_custom_call.1} parent=31 // pred_fallthru
          _
      $region32: #{tpu_custom_call.1} parent=5 // pred_fallthru
        _
      %p293 = scmp.le.s32.totalorder 2, %s16
      // Predicated region
      $region45: #{tpu_custom_call.1} parent=5 // pred_check
        %p294 = pneg %p293
      $region46: #{tpu_custom_call.1} parent=5 // pred_check_branch
        %296 = sbr.rel (%p294) target = $region48
      $region47: #{tpu_custom_call.1} parent=5 // pred_region
        %s297 = ssub.s32 %s16, 2
        // Predicated region
        $region49: #{tpu_custom_call.1} parent=47 // pred_check
          %p298 = pneg %p113
        $region50: #{tpu_custom_call.1} parent=47 // pred_check_branch
          %300 = sbr.rel (%p298) target = $region52
        $region51: #{tpu_custom_call.1} parent=47 // pred_region
          %s301 = sand.u32 %s98, 1
          %s302 = scalar_lea.sflag [#allocation4], %s301
          %s303 = sand.u32 %s98, 1
          %s304 = smul.addr %s303, 16
          %s305 = scalar_lea.vmem [#allocation7], %s304
          %307 = dma.done %s302, 256
        $region52: #{tpu_custom_call.1} parent=47 // pred_fallthru
          _
      $region48: #{tpu_custom_call.1} parent=5 // pred_fallthru
        _
    $region6: #{tpu_custom_call.1} parent=1 // loop_footer
      %s20 = sadd.s32 1, %s16
    $region7: #{tpu_custom_call.1} parent=1 // loop_footer_branch
      %15 = sbr.rel target = $region3
    $region8: #{tpu_custom_call.1} parent=1 // loop_exit
      _
    %308 = vsyncpa [#allocation3], 1
    %s309 = scalar_lea.sflag [#allocation3], 1
    %310 = vsyncpa %s309, 1
    %311 = vsyncpa [#allocation6], 1
    %312 = vsyncpa [#allocation4], 1
    %s313 = scalar_lea.sflag [#allocation4], 1
    %314 = vsyncpa %s313, 1

</llo_original>
